<compile_context>
chip_gen: v6e
topology: v6e:2x2x1
jax: 0.10.0
libtpu: 0.0.40
codegen_flags: <defaults>
</compile_context>

<pallas_src>
import jax
import jax.numpy as jnp
from jax.experimental import pallas as pl
from jax.experimental.pallas import tpu as pltpu

_LANE = 128
_SUBLANE = 8


def _round_up(x, m):
    return (x + m - 1) // m * m


# -----------------------------------------------------------------------------
# Kernel 1: feature projections   M = [ X @ Wx_cat | H @ Wh_zr ]   (bf16 out)
# -----------------------------------------------------------------------------
def _proj_kernel(x_ref, h_ref, wx_ref, wh_ref, m_ref):
    kx = wx_ref.shape[1]                      # 3 * fpad (static)
    xw = jnp.dot(x_ref[...], wx_ref[...], preferred_element_type=jnp.float32)
    hw = jnp.dot(h_ref[...], wh_ref[...], preferred_element_type=jnp.float32)
    m_ref[:, :kx] = xw.astype(m_ref.dtype)
    m_ref[:, kx:] = hw.astype(m_ref.dtype)


# -----------------------------------------------------------------------------
# Kernel 2: one wide A matmul per row panel -> Z, (A@XWh + bh), (H*R)@Whh
# -----------------------------------------------------------------------------
def _gates_kernel(a_ref, m_ref, h_ref, whh_ref, bz_ref, br_ref, bh_ref,
                  z_ref, axhb_ref, hrw_ref):
    f = z_ref.shape[-1]                       # fpad (static)
    g = jnp.dot(a_ref[...], m_ref[...], preferred_element_type=jnp.float32)
    z = jax.nn.sigmoid(g[:, 0 * f:1 * f] + g[:, 3 * f:4 * f] + bz_ref[...])
    r = jax.nn.sigmoid(g[:, 1 * f:2 * f] + g[:, 4 * f:5 * f] + br_ref[...])
    z_ref[...] = z
    axhb_ref[...] = g[:, 2 * f:3 * f] + bh_ref[...]
    hr = (h_ref[...] * r).astype(whh_ref.dtype)
    hrw_ref[...] = jnp.dot(hr, whh_ref[...],
                           preferred_element_type=jnp.float32).astype(hrw_ref.dtype)


# -----------------------------------------------------------------------------
# Kernel 3: candidate state + blend   H' = Z*H + (1-Z)*tanh(AXh+b + A@HRW)
# -----------------------------------------------------------------------------
def _blend_kernel(a_ref, hrw_ref, axhb_ref, z_ref, h_ref, out_ref):
    ah = jnp.dot(a_ref[...], hrw_ref[...], preferred_element_type=jnp.float32)
    h_tilde = jnp.tanh(axhb_ref[...] + ah)
    z = z_ref[...]
    out_ref[...] = z * h_ref[...] + (1.0 - z) * h_tilde


# -----------------------------------------------------------------------------
# Glue: dense GCN-normalized adjacency (hoistable for static graphs)
# -----------------------------------------------------------------------------
def build_normalized_adjacency(edge_index, edge_weight, num_nodes):
    row = edge_index[0]   # source
    col = edge_index[1]   # target
    if edge_weight is None:
        edge_weight = jnp.ones((edge_index.shape[1],), jnp.float32)
    deg = jnp.zeros((num_nodes,), jnp.float32).at[col].add(edge_weight)
    dis = jnp.where(deg > 0, jax.lax.rsqrt(jnp.maximum(deg, 1e-30)), 0.0)
    norm = dis[row] * edge_weight * dis[col]
    # out[target] += norm * x[source]  =>  A_hat[target, source] += norm
    return jnp.zeros((num_nodes, num_nodes), jnp.float32).at[col, row].add(norm)


# -----------------------------------------------------------------------------
# Forward wrapper
# -----------------------------------------------------------------------------
def gconv_gru_forward(X, edge_index, edge_weight, H, params, A_hat=None):
    """Pallas-backed forward. Returns (H_new, H_new, None) like the torch module."""
    f32, bf16 = jnp.float32, jnp.bfloat16
    N, fin = X.shape
    fout = params["w_h_z"].shape[1]
    fpad = _round_up(fout, _LANE)

    if H is None:
        H = jnp.zeros((N, fout), f32)
    if A_hat is None:
        A_hat = build_normalized_adjacency(edge_index, edge_weight, N)

    # --- row-tile sizing (keep contraction dim un-tiled; cap panel for VMEM) --
    tm = min(256, _round_up(N, _SUBLANE))
    np_ = _round_up(N, tm)
    while tm > _SUBLANE:
        est = 2 * (tm * np_ * 2) + 2 * (np_ * 5 * fpad * 2) + 4 * tm * fpad * 4
        if est <= (24 << 20):
            break
        tm //= 2
        np_ = _round_up(N, tm)
    nt = np_ // tm

    # --- pack / pad operands --------------------------------------------------
    def pad2(a, r, c):
        return jnp.pad(a, ((0, r - a.shape[0]), (0, c - a.shape[1])))

    wx_cat = jnp.concatenate(
        [pad2(params["w_x_z"], fin, fpad),
         pad2(params["w_x_r"], fin, fpad),
         pad2(params["w_x_h"], fin, fpad)], axis=1).astype(bf16)   # [fin, 3*fpad]
    wh_zr = jnp.concatenate(
        [pad2(params["w_h_z"], fpad, fpad),
         pad2(params["w_h_r"], fpad, fpad)], axis=1).astype(bf16)  # [fpad, 2*fpad]
    whh = pad2(params["w_h_h"], fpad, fpad).astype(bf16)           # [fpad, fpad]

    bz = pad2(params["b_x_z"] + params["b_h_z"], 1, fpad).astype(f32)
    br = pad2(params["b_x_r"] + params["b_h_r"], 1, fpad).astype(f32)
    bh = pad2(params["b_x_h"] + params["b_h_h"], 1, fpad).astype(f32)

    a_pad = pad2(A_hat.astype(f32), np_, np_).astype(bf16)         # [np_, np_]
    x_pad = pad2(X.astype(f32), np_, fin).astype(bf16)             # [np_, fin]
    h_pad = pad2(H.astype(f32), np_, fpad)                         # [np_, fpad] f32
    h_bf = h_pad.astype(bf16)

    parallel = pltpu.CompilerParams(dimension_semantics=("parallel",))
    row_map = lambda i: (i, 0)
    full_map = lambda i: (0, 0)

    # ---- kernel 1: projections M = [X@Wx_cat | H@Wh_zr] ----------------------
    m_cat = pl.pallas_call(
        _proj_kernel,
        grid=(nt,),
        in_specs=[pl.BlockSpec((tm, fin), row_map),
                  pl.BlockSpec((tm, fpad), row_map),
                  pl.BlockSpec((fin, 3 * fpad), full_map),
                  pl.BlockSpec((fpad, 2 * fpad), full_map)],
        out_specs=pl.BlockSpec((tm, 5 * fpad), row_map),
        out_shape=jax.ShapeDtypeStruct((np_, 5 * fpad), bf16),
        compiler_params=parallel,
        cost_estimate=pl.CostEstimate(
            flops=2 * np_ * fpad * (3 * fin + 2 * fpad),
            transcendentals=0,
            bytes_accessed=2 * np_ * (fin + fpad) + 2 * np_ * 5 * fpad
                           + 2 * fpad * (3 * fin + 2 * fpad)),
    )(x_pad, h_bf, wx_cat, wh_zr)

    # ---- kernel 2: gates (single wide A matmul per row panel) ----------------
    z_pad, axhb, hrw = pl.pallas_call(
        _gates_kernel,
        grid=(nt,),
        in_specs=[pl.BlockSpec((tm, np_), row_map),
                  pl.BlockSpec((np_, 5 * fpad), full_map),
                  pl.BlockSpec((tm, fpad), row_map),
                  pl.BlockSpec((fpad, fpad), full_map),
                  pl.BlockSpec((1, fpad), full_map),
                  pl.BlockSpec((1, fpad), full_map),
                  pl.BlockSpec((1, fpad), full_map)],
        out_specs=(pl.BlockSpec((tm, fpad), row_map),
                   pl.BlockSpec((tm, fpad), row_map),
                   pl.BlockSpec((tm, fpad), row_map)),
        out_shape=(jax.ShapeDtypeStruct((np_, fpad), f32),
                   jax.ShapeDtypeStruct((np_, fpad), f32),
                   jax.ShapeDtypeStruct((np_, fpad), bf16)),
        compiler_params=parallel,
        cost_estimate=pl.CostEstimate(
            flops=2 * np_ * np_ * 5 * fpad + 2 * np_ * fpad * fpad,
            transcendentals=2 * np_ * fpad,
            bytes_accessed=2 * np_ * np_ + 2 * np_ * 5 * fpad + 12 * np_ * fpad),
    )(a_pad, m_cat, h_pad, whh, bz, br, bh)

    # ---- kernel 3: candidate + blend ------------------------------------------
    h_new = pl.pallas_call(
        _blend_kernel,
        grid=(nt,),
        in_specs=[pl.BlockSpec((tm, np_), row_map),
                  pl.BlockSpec((np_, fpad), full_map),
                  pl.BlockSpec((tm, fpad), row_map),
                  pl.BlockSpec((tm, fpad), row_map),
                  pl.BlockSpec((tm, fpad), row_map)],
        out_specs=pl.BlockSpec((tm, fpad), row_map),
        out_shape=jax.ShapeDtypeStruct((np_, fpad), f32),
        compiler_params=parallel,
        cost_estimate=pl.CostEstimate(
            flops=2 * np_ * np_ * fpad,
            transcendentals=np_ * fpad,
            bytes_accessed=2 * np_ * np_ + 2 * np_ * fpad + 16 * np_ * fpad),
    )(a_pad, hrw, axhb, z_pad, h_pad)

    h_out = h_new[:N, :fout]
    return h_out, h_out, None


# -----------------------------------------------------------------------------
# Deterministic parameter init (glorot weights stored as [F_in, F_out];
# small random biases so the bias path is exercised in the numerics check).
# -----------------------------------------------------------------------------
def init_params(key, in_channels, out_channels):
    names_in = {
        "w_x_z": in_channels, "w_h_z": out_channels,
        "w_x_r": in_channels, "w_h_r": out_channels,
        "w_x_h": in_channels, "w_h_h": out_channels,
    }
    params = {}
    keys = jax.random.split(key, 2 * len(names_in))
    for i, (name, fan_in) in enumerate(names_in.items()):
        limit = (6.0 / (fan_in + out_channels)) ** 0.5
        params[name] = jax.random.uniform(
            keys[2 * i], (fan_in, out_channels), jnp.float32, -limit, limit)
        params[name.replace("w_", "b_")] = jax.random.uniform(
            keys[2 * i + 1], (1, out_channels), jnp.float32, -0.1, 0.1)
    return params


# Pure-f32 JAX reference (mirrors the torch module's forward).
def _reference_forward(X, A_hat, H, params):
    def gcn(inp, w, b):
        return A_hat @ (inp @ w) + b
    Z = jax.nn.sigmoid(gcn(X, params["w_x_z"], params["b_x_z"])
                       + gcn(H, params["w_h_z"], params["b_h_z"]))
    R = jax.nn.sigmoid(gcn(X, params["w_x_r"], params["b_x_r"])
                       + gcn(H, params["w_h_r"], params["b_h_r"]))
    H_tilde = jnp.tanh(gcn(X, params["w_x_h"], params["b_x_h"])
                       + gcn(H * R, params["w_h_h"], params["b_h_h"]))
    return Z * H + (1.0 - Z) * H_tilde


if __name__ == "__main__":
    key = jax.random.PRNGKey(0)
    k_x, k_e, k_w, k_p = jax.random.split(key, 4)

    N = 16            # number of graph nodes
    in_channels = 4
    out_channels = 32
    E = 48            # number of edges

    X = jax.random.normal(k_x, (N, in_channels), jnp.float32)
    edge_index = jax.random.randint(k_e, (2, E), 0, N, dtype=jnp.int32)
    edge_weight = jax.random.uniform(k_w, (E,), jnp.float32, 0.5, 1.5)
    params = init_params(k_p, in_channels, out_channels)

    # Static graph across timesteps: hoist adjacency construction out of the step.
    A_hat = build_normalized_adjacency(edge_index, edge_weight, N)

    step = jax.jit(gconv_gru_forward)

    H = None
    for _ in range(2):        # two steps: exercises both H==0 and H!=0 paths
        H, H_state, C = step(X, edge_index, edge_weight, H, params, A_hat)
    jax.block_until_ready(H)

    assert H.shape == (N, out_channels)
    assert C is None

    # Numerical check vs pure-f32 reference (bf16 MXU inputs -> loose tolerance).
    H_ref = jnp.zeros((N, out_channels), jnp.float32)
    for _ in range(2):
        H_ref = _reference_forward(X, A_hat, H_ref, params)
    max_err = float(jnp.max(jnp.abs(H - H_ref)))
    assert jnp.allclose(H, H_ref, rtol=5e-2, atol=3e-2), max_err

    print("KERNEL_OK")
</pallas_src>

<mosaic_0001>
module attributes {stable_mosaic.version = 11 : i64} {
  func.func @_proj_kernel(%arg0: i32, %arg1: memref<16x4xbf16, #tpu.memory_space<vmem>>, %arg2: memref<16x128xbf16, #tpu.memory_space<vmem>>, %arg3: memref<4x384xbf16, #tpu.memory_space<vmem>>, %arg4: memref<128x256xbf16, #tpu.memory_space<vmem>>, %arg5: memref<16x640xbf16, #tpu.memory_space<vmem>>) attributes {dimension_semantics = [#tpu.dimension_semantics<parallel>], iteration_bounds = array<i64: 1>, scalar_prefetch = 0 : i64, scratch_operands = 0 : i64, tpu.core_type = #tpu.core_type<tc>, window_params = [{transform_indices = @transform_0, window_bounds = array<i64: 16, 4>}, {transform_indices = @transform_1, window_bounds = array<i64: 16, 128>}, {pipeline_mode = #tpu.pipeline_mode<synchronous>, transform_indices = @transform_2, window_bounds = array<i64: 4, 384>}, {pipeline_mode = #tpu.pipeline_mode<synchronous>, transform_indices = @transform_3, window_bounds = array<i64: 128, 256>}, {transform_indices = @transform_4, window_bounds = array<i64: 16, 640>}]} {
    %c0 = arith.constant 0 : index
    %c0_0 = arith.constant 0 : index
    %0 = vector.load %arg1[%c0, %c0_0] : memref<16x4xbf16, #tpu.memory_space<vmem>>, vector<16x4xbf16>
    %c0_1 = arith.constant 0 : index
    %c0_2 = arith.constant 0 : index
    %1 = vector.load %arg3[%c0_1, %c0_2] : memref<4x384xbf16, #tpu.memory_space<vmem>>, vector<4x384xbf16>
    %cst = arith.constant dense<0.000000e+00> : vector<16x384xf32>
    %2 = tpu.matmul %0, %1, %cst {dimension_numbers = #tpu.dot_dimension_numbers<[1], [0], [0], [1], [0, 0, 1, 1], [], []>} : vector<16x4xbf16>, vector<4x384xbf16>, vector<16x384xf32> -> vector<16x384xf32>
    %c0_3 = arith.constant 0 : index
    %c0_4 = arith.constant 0 : index
    %3 = vector.load %arg2[%c0_3, %c0_4] : memref<16x128xbf16, #tpu.memory_space<vmem>>, vector<16x128xbf16>
    %c0_5 = arith.constant 0 : index
    %c0_6 = arith.constant 0 : index
    %4 = vector.load %arg4[%c0_5, %c0_6] : memref<128x256xbf16, #tpu.memory_space<vmem>>, vector<128x256xbf16>
    %cst_7 = arith.constant dense<0.000000e+00> : vector<16x256xf32>
    %5 = tpu.matmul %3, %4, %cst_7 {dimension_numbers = #tpu.dot_dimension_numbers<[1], [0], [0], [1], [0, 0, 1, 1], [], []>} : vector<16x128xbf16>, vector<128x256xbf16>, vector<16x256xf32> -> vector<16x256xf32>
    %6 = arith.truncf %2 : vector<16x384xf32> to vector<16x384xbf16>
    %c0_8 = arith.constant 0 : index
    %c0_9 = arith.constant 0 : index
    %7 = vector.load %arg5[%c0_8, %c0_9] : memref<16x640xbf16, #tpu.memory_space<vmem>>, vector<16x384xbf16>
    tpu.vector_store %arg5[%c0_8, %c0_9], %6 {strides = array<i32>} : memref<16x640xbf16, #tpu.memory_space<vmem>>, vector<16x384xbf16>,
    %8 = arith.truncf %5 : vector<16x256xf32> to vector<16x256xbf16>
    %c0_10 = arith.constant 0 : index
    %c384 = arith.constant 384 : index
    %9 = vector.load %arg5[%c0_10, %c384] : memref<16x640xbf16, #tpu.memory_space<vmem>>, vector<16x256xbf16>
    tpu.vector_store %arg5[%c0_10, %c384], %8 {strides = array<i32>} : memref<16x640xbf16, #tpu.memory_space<vmem>>, vector<16x256xbf16>,
    return
  }
  func.func @transform_0(%arg0: i32) -> (i32, i32) {
    %c0_i32 = arith.constant 0 : i32
    %c0_i32_0 = arith.constant 0 : i32
    return %arg0, %c0_i32 : i32, i32
  }
  func.func @transform_1(%arg0: i32) -> (i32, i32) {
    %c0_i32 = arith.constant 0 : i32
    %c0_i32_0 = arith.constant 0 : i32
    return %arg0, %c0_i32 : i32, i32
  }
  func.func @transform_2(%arg0: i32) -> (i32, i32) {
    %c0_i32 = arith.constant 0 : i32
    %c0_i32_0 = arith.constant 0 : i32
    %c0_i32_1 = arith.constant 0 : i32
    return %c0_i32, %c0_i32_0 : i32, i32
  }
  func.func @transform_3(%arg0: i32) -> (i32, i32) {
    %c0_i32 = arith.constant 0 : i32
    %c0_i32_0 = arith.constant 0 : i32
    %c0_i32_1 = arith.constant 0 : i32
    return %c0_i32, %c0_i32_0 : i32, i32
  }
  func.func @transform_4(%arg0: i32) -> (i32, i32) {
    %c0_i32 = arith.constant 0 : i32
    %c0_i32_0 = arith.constant 0 : i32
    return %arg0, %c0_i32 : i32, i32
  }
}

module attributes {stable_mosaic.version = 11 : i64} {
  func.func @_gates_kernel(%arg0: i32, %arg1: memref<16x16xbf16, #tpu.memory_space<vmem>>, %arg2: memref<16x640xbf16, #tpu.memory_space<vmem>>, %arg3: memref<16x128xf32, #tpu.memory_space<vmem>>, %arg4: memref<128x128xbf16, #tpu.memory_space<vmem>>, %arg5: memref<1x128xf32, #tpu.memory_space<vmem>>, %arg6: memref<1x128xf32, #tpu.memory_space<vmem>>, %arg7: memref<1x128xf32, #tpu.memory_space<vmem>>, %arg8: memref<16x128xf32, #tpu.memory_space<vmem>>, %arg9: memref<16x128xf32, #tpu.memory_space<vmem>>, %arg10: memref<16x128xbf16, #tpu.memory_space<vmem>>) attributes {dimension_semantics = [#tpu.dimension_semantics<parallel>], iteration_bounds = array<i64: 1>, scalar_prefetch = 0 : i64, scratch_operands = 0 : i64, tpu.core_type = #tpu.core_type<tc>, window_params = [{transform_indices = @transform_0, window_bounds = array<i64: 16, 16>}, {pipeline_mode = #tpu.pipeline_mode<synchronous>, transform_indices = @transform_1, window_bounds = array<i64: 16, 640>}, {transform_indices = @transform_2, window_bounds = array<i64: 16, 128>}, {pipeline_mode = #tpu.pipeline_mode<synchronous>, transform_indices = @transform_3, window_bounds = array<i64: 128, 128>}, {pipeline_mode = #tpu.pipeline_mode<synchronous>, transform_indices = @transform_4, window_bounds = array<i64: 1, 128>}, {pipeline_mode = #tpu.pipeline_mode<synchronous>, transform_indices = @transform_5, window_bounds = array<i64: 1, 128>}, {pipeline_mode = #tpu.pipeline_mode<synchronous>, transform_indices = @transform_6, window_bounds = array<i64: 1, 128>}, {transform_indices = @transform_7, window_bounds = array<i64: 16, 128>}, {transform_indices = @transform_8, window_bounds = array<i64: 16, 128>}, {transform_indices = @transform_9, window_bounds = array<i64: 16, 128>}]} {
    %c0 = arith.constant 0 : index
    %c0_0 = arith.constant 0 : index
    %0 = vector.load %arg1[%c0, %c0_0] : memref<16x16xbf16, #tpu.memory_space<vmem>>, vector<16x16xbf16>
    %c0_1 = arith.constant 0 : index
    %c0_2 = arith.constant 0 : index
    %1 = vector.load %arg2[%c0_1, %c0_2] : memref<16x640xbf16, #tpu.memory_space<vmem>>, vector<16x640xbf16>
    %cst = arith.constant dense<0.000000e+00> : vector<16x640xf32>
    %2 = tpu.matmul %0, %1, %cst {dimension_numbers = #tpu.dot_dimension_numbers<[1], [0], [0], [1], [0, 0, 1, 1], [], []>} : vector<16x16xbf16>, vector<16x640xbf16>, vector<16x640xf32> -> vector<16x640xf32>
    %3 = vector.extract_strided_slice %2 {offsets = [0, 0], sizes = [16, 128], strides = [1, 1]} : vector<16x640xf32> to vector<16x128xf32>
    %4 = vector.extract_strided_slice %2 {offsets = [0, 384], sizes = [16, 128], strides = [1, 1]} : vector<16x640xf32> to vector<16x128xf32>
    %5 = arith.addf %3, %4 : vector<16x128xf32>
    %c0_3 = arith.constant 0 : index
    %c0_4 = arith.constant 0 : index
    %6 = vector.load %arg5[%c0_3, %c0_4] : memref<1x128xf32, #tpu.memory_space<vmem>>, vector<1x128xf32>
    %7 = vector.broadcast %6 : vector<1x128xf32> to vector<16x128xf32>
    %8 = arith.addf %5, %7 : vector<16x128xf32>
    %9 = arith.negf %8 : vector<16x128xf32>
    %10 = math.exp %9 : vector<16x128xf32>
    %cst_5 = arith.constant 1.000000e+00 : f32
    %11 = vector.broadcast %cst_5 : f32 to vector<16x128xf32>
    %12 = arith.addf %11, %10 : vector<16x128xf32>
    %13 = arith.divf %11, %12 : vector<16x128xf32>
    %14 = vector.extract_strided_slice %2 {offsets = [0, 128], sizes = [16, 128], strides = [1, 1]} : vector<16x640xf32> to vector<16x128xf32>
    %15 = vector.extract_strided_slice %2 {offsets = [0, 512], sizes = [16, 128], strides = [1, 1]} : vector<16x640xf32> to vector<16x128xf32>
    %16 = arith.addf %14, %15 : vector<16x128xf32>
    %c0_6 = arith.constant 0 : index
    %c0_7 = arith.constant 0 : index
    %17 = vector.load %arg6[%c0_6, %c0_7] : memref<1x128xf32, #tpu.memory_space<vmem>>, vector<1x128xf32>
    %18 = vector.broadcast %17 : vector<1x128xf32> to vector<16x128xf32>
    %19 = arith.addf %16, %18 : vector<16x128xf32>
    %20 = arith.negf %19 : vector<16x128xf32>
    %21 = math.exp %20 : vector<16x128xf32>
    %cst_8 = arith.constant 1.000000e+00 : f32
    %22 = vector.broadcast %cst_8 : f32 to vector<16x128xf32>
    %23 = arith.addf %22, %21 : vector<16x128xf32>
    %24 = arith.divf %22, %23 : vector<16x128xf32>
    %c0_9 = arith.constant 0 : index
    %c0_10 = arith.constant 0 : index
    %25 = vector.load %arg8[%c0_9, %c0_10] : memref<16x128xf32, #tpu.memory_space<vmem>>, vector<16x128xf32>
    tpu.vector_store %arg8[%c0_9, %c0_10], %13 {strides = array<i32>} : memref<16x128xf32, #tpu.memory_space<vmem>>, vector<16x128xf32>,
    %26 = vector.extract_strided_slice %2 {offsets = [0, 256], sizes = [16, 128], strides = [1, 1]} : vector<16x640xf32> to vector<16x128xf32>
    %c0_11 = arith.constant 0 : index
    %c0_12 = arith.constant 0 : index
    %27 = vector.load %arg7[%c0_11, %c0_12] : memref<1x128xf32, #tpu.memory_space<vmem>>, vector<1x128xf32>
    %28 = vector.broadcast %27 : vector<1x128xf32> to vector<16x128xf32>
    %29 = arith.addf %26, %28 : vector<16x128xf32>
    %c0_13 = arith.constant 0 : index
    %c0_14 = arith.constant 0 : index
    %30 = vector.load %arg9[%c0_13, %c0_14] : memref<16x128xf32, #tpu.memory_space<vmem>>, vector<16x128xf32>
    tpu.vector_store %arg9[%c0_13, %c0_14], %29 {strides = array<i32>} : memref<16x128xf32, #tpu.memory_space<vmem>>, vector<16x128xf32>,
    %c0_15 = arith.constant 0 : index
    %c0_16 = arith.constant 0 : index
    %31 = vector.load %arg3[%c0_15, %c0_16] : memref<16x128xf32, #tpu.memory_space<vmem>>, vector<16x128xf32>
    %32 = arith.mulf %31, %24 : vector<16x128xf32>
    %33 = arith.truncf %32 : vector<16x128xf32> to vector<16x128xbf16>
    %c0_17 = arith.constant 0 : index
    %c0_18 = arith.constant 0 : index
    %34 = vector.load %arg4[%c0_17, %c0_18] : memref<128x128xbf16, #tpu.memory_space<vmem>>, vector<128x128xbf16>
    %cst_19 = arith.constant dense<0.000000e+00> : vector<16x128xf32>
    %35 = tpu.matmul %33, %34, %cst_19 {dimension_numbers = #tpu.dot_dimension_numbers<[1], [0], [0], [1], [0, 0, 1, 1], [], []>} : vector<16x128xbf16>, vector<128x128xbf16>, vector<16x128xf32> -> vector<16x128xf32>
    %36 = arith.truncf %35 : vector<16x128xf32> to vector<16x128xbf16>
    %c0_20 = arith.constant 0 : index
    %c0_21 = arith.constant 0 : index
    %37 = vector.load %arg10[%c0_20, %c0_21] : memref<16x128xbf16, #tpu.memory_space<vmem>>, vector<16x128xbf16>
    tpu.vector_store %arg10[%c0_20, %c0_21], %36 {strides = array<i32>} : memref<16x128xbf16, #tpu.memory_space<vmem>>, vector<16x128xbf16>,
    return
  }
  func.func @transform_0(%arg0: i32) -> (i32, i32) {
    %c0_i32 = arith.constant 0 : i32
    %c0_i32_0 = arith.constant 0 : i32
    return %arg0, %c0_i32 : i32, i32
  }
  func.func @transform_1(%arg0: i32) -> (i32, i32) {
    %c0_i32 = arith.constant 0 : i32
    %c0_i32_0 = arith.constant 0 : i32
    %c0_i32_1 = arith.constant 0 : i32
    return %c0_i32, %c0_i32_0 : i32, i32
  }
  func.func @transform_2(%arg0: i32) -> (i32, i32) {
    %c0_i32 = arith.constant 0 : i32
    %c0_i32_0 = arith.constant 0 : i32
    return %arg0, %c0_i32 : i32, i32
  }
  func.func @transform_3(%arg0: i32) -> (i32, i32) {
    %c0_i32 = arith.constant 0 : i32
    %c0_i32_0 = arith.constant 0 : i32
    %c0_i32_1 = arith.constant 0 : i32
    return %c0_i32, %c0_i32_0 : i32, i32
  }
  func.func @transform_4(%arg0: i32) -> (i32, i32) {
    %c0_i32 = arith.constant 0 : i32
    %c0_i32_0 = arith.constant 0 : i32
    %c0_i32_1 = arith.constant 0 : i32
    return %c0_i32, %c0_i32_0 : i32, i32
  }
  func.func @transform_5(%arg0: i32) -> (i32, i32) {
    %c0_i32 = arith.constant 0 : i32
    %c0_i32_0 = arith.constant 0 : i32
    %c0_i32_1 = arith.constant 0 : i32
    return %c0_i32, %c0_i32_0 : i32, i32
  }
  func.func @transform_6(%arg0: i32) -> (i32, i32) {
    %c0_i32 = arith.constant 0 : i32
    %c0_i32_0 = arith.constant 0 : i32
    %c0_i32_1 = arith.constant 0 : i32
    return %c0_i32, %c0_i32_0 : i32, i32
  }
  func.func @transform_7(%arg0: i32) -> (i32, i32) {
    %c0_i32 = arith.constant 0 : i32
    %c0_i32_0 = arith.constant 0 : i32
    return %arg0, %c0_i32 : i32, i32
  }
  func.func @transform_8(%arg0: i32) -> (i32, i32) {
    %c0_i32 = arith.constant 0 : i32
    %c0_i32_0 = arith.constant 0 : i32
    return %arg0, %c0_i32 : i32, i32
  }
  func.func @transform_9(%arg0: i32) -> (i32, i32) {
    %c0_i32 = arith.constant 0 : i32
    %c0_i32_0 = arith.constant 0 : i32
    return %arg0, %c0_i32 : i32, i32
  }
}

module attributes {stable_mosaic.version = 11 : i64} {
  func.func @_blend_kernel(%arg0: i32, %arg1: memref<16x16xbf16, #tpu.memory_space<vmem>>, %arg2: memref<16x128xbf16, #tpu.memory_space<vmem>>, %arg3: memref<16x128xf32, #tpu.memory_space<vmem>>, %arg4: memref<16x128xf32, #tpu.memory_space<vmem>>, %arg5: memref<16x128xf32, #tpu.memory_space<vmem>>, %arg6: memref<16x128xf32, #tpu.memory_space<vmem>>) attributes {dimension_semantics = [#tpu.dimension_semantics<parallel>], iteration_bounds = array<i64: 1>, scalar_prefetch = 0 : i64, scratch_operands = 0 : i64, tpu.core_type = #tpu.core_type<tc>, window_params = [{transform_indices = @transform_0, window_bounds = array<i64: 16, 16>}, {pipeline_mode = #tpu.pipeline_mode<synchronous>, transform_indices = @transform_1, window_bounds = array<i64: 16, 128>}, {transform_indices = @transform_2, window_bounds = array<i64: 16, 128>}, {transform_indices = @transform_3, window_bounds = array<i64: 16, 128>}, {transform_indices = @transform_4, window_bounds = array<i64: 16, 128>}, {transform_indices = @transform_5, window_bounds = array<i64: 16, 128>}]} {
    %c0 = arith.constant 0 : index
    %c0_0 = arith.constant 0 : index
    %0 = vector.load %arg1[%c0, %c0_0] : memref<16x16xbf16, #tpu.memory_space<vmem>>, vector<16x16xbf16>
    %c0_1 = arith.constant 0 : index
    %c0_2 = arith.constant 0 : index
    %1 = vector.load %arg2[%c0_1, %c0_2] : memref<16x128xbf16, #tpu.memory_space<vmem>>, vector<16x128xbf16>
    %cst = arith.constant dense<0.000000e+00> : vector<16x128xf32>
    %2 = tpu.matmul %0, %1, %cst {dimension_numbers = #tpu.dot_dimension_numbers<[1], [0], [0], [1], [0, 0, 1, 1], [], []>} : vector<16x16xbf16>, vector<16x128xbf16>, vector<16x128xf32> -> vector<16x128xf32>
    %c0_3 = arith.constant 0 : index
    %c0_4 = arith.constant 0 : index
    %3 = vector.load %arg3[%c0_3, %c0_4] : memref<16x128xf32, #tpu.memory_space<vmem>>, vector<16x128xf32>
    %4 = arith.addf %3, %2 : vector<16x128xf32>
    %5 = math.tanh %4 : vector<16x128xf32>
    %c0_5 = arith.constant 0 : index
    %c0_6 = arith.constant 0 : index
    %6 = vector.load %arg4[%c0_5, %c0_6] : memref<16x128xf32, #tpu.memory_space<vmem>>, vector<16x128xf32>
    %c0_7 = arith.constant 0 : index
    %c0_8 = arith.constant 0 : index
    %7 = vector.load %arg5[%c0_7, %c0_8] : memref<16x128xf32, #tpu.memory_space<vmem>>, vector<16x128xf32>
    %8 = arith.mulf %6, %7 : vector<16x128xf32>
    %cst_9 = arith.constant 1.000000e+00 : f32
    %9 = vector.broadcast %cst_9 : f32 to vector<16x128xf32>
    %10 = arith.subf %9, %6 : vector<16x128xf32>
    %11 = arith.mulf %10, %5 : vector<16x128xf32>
    %12 = arith.addf %8, %11 : vector<16x128xf32>
    %c0_10 = arith.constant 0 : index
    %c0_11 = arith.constant 0 : index
    %13 = vector.load %arg6[%c0_10, %c0_11] : memref<16x128xf32, #tpu.memory_space<vmem>>, vector<16x128xf32>
    tpu.vector_store %arg6[%c0_10, %c0_11], %12 {strides = array<i32>} : memref<16x128xf32, #tpu.memory_space<vmem>>, vector<16x128xf32>,
    return
  }
  func.func @transform_0(%arg0: i32) -> (i32, i32) {
    %c0_i32 = arith.constant 0 : i32
    %c0_i32_0 = arith.constant 0 : i32
    return %arg0, %c0_i32 : i32, i32
  }
  func.func @transform_1(%arg0: i32) -> (i32, i32) {
    %c0_i32 = arith.constant 0 : i32
    %c0_i32_0 = arith.constant 0 : i32
    %c0_i32_1 = arith.constant 0 : i32
    return %c0_i32, %c0_i32_0 : i32, i32
  }
  func.func @transform_2(%arg0: i32) -> (i32, i32) {
    %c0_i32 = arith.constant 0 : i32
    %c0_i32_0 = arith.constant 0 : i32
    return %arg0, %c0_i32 : i32, i32
  }
  func.func @transform_3(%arg0: i32) -> (i32, i32) {
    %c0_i32 = arith.constant 0 : i32
    %c0_i32_0 = arith.constant 0 : i32
    return %arg0, %c0_i32 : i32, i32
  }
  func.func @transform_4(%arg0: i32) -> (i32, i32) {
    %c0_i32 = arith.constant 0 : i32
    %c0_i32_0 = arith.constant 0 : i32
    return %arg0, %c0_i32 : i32, i32
  }
  func.func @transform_5(%arg0: i32) -> (i32, i32) {
    %c0_i32 = arith.constant 0 : i32
    %c0_i32_0 = arith.constant 0 : i32
    return %arg0, %c0_i32 : i32, i32
  }
}

</mosaic_0001>

<llo_original>
// kernel: gconv_gru_forward.5
$region0: #{gconv_gru_forward.5}
  #allocation0 [shape = 'u32[]', space=smem, size = 0x4, offset = 0x4, fixed_abs, tag = 'smem constant byte address 0x4 - core index']
  #allocation1 [shape = 'u32[144,128]{1,0:T(1,128)}', space=vmem, size = 0x12000, scoped, tag = 'internal scratch']
  %s0 = inlined_call_operand.vmem [shape: bf16[16,16], index: 0, kind: input, shape index: {}]
  %s1 = inlined_call_operand.vmem [shape: bf16[16,128], index: 1, kind: input, shape index: {}]
  %s2 = inlined_call_operand.vmem [shape: f32[16,128], index: 2, kind: input, shape index: {}]
  %s3 = inlined_call_operand.vmem [shape: f32[16,128], index: 3, kind: input, shape index: {}]
  %s4 = inlined_call_operand.vmem [shape: f32[16,128], index: 4, kind: input, shape index: {}]
  %s5 = inlined_call_operand.vmem [shape: f32[16,128], index: 5, kind: output, shape index: {}]
  %s6 = sld [smem:[#allocation0]]
  $region30: #{gconv_gru_forward.5} parent=0
    _
  %s8 = ssub.s32 1, %s6
  %s9 = scalar_select 0, %s8, %s6
  // Predicated region
  $region2: #{gconv_gru_forward.5} parent=0 // pred_check
    _
  $region3: #{gconv_gru_forward.5} parent=0 // pred_check_branch
    %11 = sbr.rel (0) target = $region5
  $region4: #{gconv_gru_forward.5} parent=0 // pred_region
    _
  $region5: #{gconv_gru_forward.5} parent=0 // pred_fallthru
    _
  // Predicated region
  $region6: #{gconv_gru_forward.5} parent=0 // pred_check
    _
  $region7: #{gconv_gru_forward.5} parent=0 // pred_check_branch
    %13 = sbr.rel (0) target = $region9
  $region8: #{gconv_gru_forward.5} parent=0 // pred_region
    _
  $region9: #{gconv_gru_forward.5} parent=0 // pred_fallthru
    _
  // Predicated region
  $region10: #{gconv_gru_forward.5} parent=0 // pred_check
    _
  $region11: #{gconv_gru_forward.5} parent=0 // pred_check_branch
    %15 = sbr.rel (0) target = $region13
  $region12: #{gconv_gru_forward.5} parent=0 // pred_region
    _
  $region13: #{gconv_gru_forward.5} parent=0 // pred_fallthru
    _
  // Predicated region
  $region14: #{gconv_gru_forward.5} parent=0 // pred_check
    _
  $region15: #{gconv_gru_forward.5} parent=0 // pred_check_branch
    %17 = sbr.rel (0) target = $region17
  $region16: #{gconv_gru_forward.5} parent=0 // pred_region
    _
  $region17: #{gconv_gru_forward.5} parent=0 // pred_fallthru
    _
  // Predicated region
  $region18: #{gconv_gru_forward.5} parent=0 // pred_check
    _
  $region19: #{gconv_gru_forward.5} parent=0 // pred_check_branch
    %19 = sbr.rel (0) target = $region21
  $region20: #{gconv_gru_forward.5} parent=0 // pred_region
    _
  $region21: #{gconv_gru_forward.5} parent=0 // pred_fallthru
    _
  %v21 = vld [vmem:[%s0] sm:$0xf]
  %v22 = vld [vmem:[%s0 + $0x4] sm:$0xf]
  %v23 = vld [vmem:[%s1] sm:$0xf]
  %v24 = vld [vmem:[%s1 + $0x4] sm:$0xf]
  %v27 = vunpack.c.l.b16 %v21
  %v28 = vunpack.c.l.b16 %v22
  %v29 = vpack.c.b16 %v28, %v27
  %v32 = vunpack.c.l.b16 %v23
  %v33 = vunpack.c.l.b16 %v24
  %v34 = vpack.c.b16 %v33, %v32
  %vm36 = vcmask 130048
  %v38 = vsel %vm36, %v29, 0
  %40 = vmatprep.subr.bf16.mxu0 0
  %41 = vmatpush1.bf16.msra.mxu0 0
  %42 = vmatprep.subr.bf16.mxu0 0
  %43 = vmatpush1.bf16.msra.mxu0 0
  %44 = vmatprep.subr.bf16.mxu0 0
  %45 = vmatpush1.bf16.msra.mxu0 0
  %46 = vmatprep.subr.bf16.mxu0 0
  %47 = vmatpush1.bf16.msra.mxu0 0
  %48 = vmatprep.subr.bf16.mxu0 0
  %49 = vmatpush1.bf16.msra.mxu0 0
  %50 = vmatprep.subr.bf16.mxu0 0
  %51 = vmatpush1.bf16.msra.mxu0 0
  %52 = vmatprep.subr.bf16.mxu0 0
  %53 = vmatpush1.bf16.msra.mxu0 0
  %54 = vmatprep.subr.bf16.mxu0 0
  %55 = vmatpush1.bf16.msra.mxu0 %v34
  %56 = vmatprep.subr.bf16.mxu0 0
  %57 = vmatpush2.bf16.msra.mxu0 0
  %58 = vmatprep.subr.bf16.mxu0 0
  %59 = vmatpush2.bf16.msra.mxu0 0
  %60 = vmatprep.subr.bf16.mxu0 0
  %61 = vmatpush2.bf16.msra.mxu0 0
  %62 = vmatprep.subr.bf16.mxu0 0
  %63 = vmatpush2.bf16.msra.mxu0 0
  %64 = vmatprep.subr.bf16.mxu0 0
  %65 = vmatpush2.bf16.msra.mxu0 0
  %66 = vmatprep.subr.bf16.mxu0 0
  %67 = vmatpush2.bf16.msra.mxu0 0
  %68 = vmatprep.subr.bf16.mxu0 0
  %69 = vmatpush2.bf16.msra.mxu0 0
  %70 = vmatprep.subr.bf16.mxu0 0
  %71 = vmatpush2.bf16.msra.mxu0 0
  %72 = vmatprep.mubr.bf16.mxu0 0
  %73 = vmatmul.mubr.bf16.gmra.mxu0 %v38
  %v74 = vpop.f32.mrf.mxu0
  %v75 = vadd.f32 0.0, %v74
  %v76 = vpop.f32.mrf.mxu0
  %v77 = vpop.f32.mrf.mxu0
  %v78 = vadd.f32 0.0, %v77
  %v79 = vpop.f32.mrf.mxu0
  %80 = vdwg.mxu0
  %v81 = vld [vmem:[%s2] sm:$0xff]
  %v82 = vld [vmem:[%s2 + $0x8] sm:$0xff]
  %v83 = vadd.f32 %v81, %v75
  %v84 = vadd.f32 %v82, %v78
  %v85 = vtanh.pop %v83
  %v86 = vtanh.pop %v84
  %v87 = vld [vmem:[%s3] sm:$0xff]
  %v88 = vld [vmem:[%s3 + $0x8] sm:$0xff]
  %v89 = vld [vmem:[%s4] sm:$0xff]
  %v90 = vld [vmem:[%s4 + $0x8] sm:$0xff]
  %v91 = vmul.f32 %v87, %v89
  %v92 = vmul.f32 %v88, %v90
  %v93 = vsub.f32 1.0, %v87
  %v94 = vsub.f32 1.0, %v88
  %v95 = vmul.f32 %v93, %v85
  %v96 = vmul.f32 %v94, %v86
  %v97 = vadd.f32 %v91, %v95
  %v98 = vadd.f32 %v92, %v96
  %99 = vst [vmem:[%s5] sm:$0xff] %v97
  %100 = vst [vmem:[%s5 + $0x8] sm:$0xff] %v98
  // Predicated region
  $region22: #{gconv_gru_forward.5} parent=0 // pred_check
    _
  $region23: #{gconv_gru_forward.5} parent=0 // pred_check_branch
    %102 = sbr.rel (0) target = $region25
  $region24: #{gconv_gru_forward.5} parent=0 // pred_region
    _
  $region25: #{gconv_gru_forward.5} parent=0 // pred_fallthru
    _
  // Predicated region
  $region26: #{gconv_gru_forward.5} parent=0 // pred_check
    _
  $region27: #{gconv_gru_forward.5} parent=0 // pred_check_branch
    %104 = sbr.rel (0) target = $region29
  $region28: #{gconv_gru_forward.5} parent=0 // pred_region
    _
  $region29: #{gconv_gru_forward.5} parent=0 // pred_fallthru
    _

// kernel: gconv_gru_forward.3
$region0: #{gconv_gru_forward.3}
  #allocation0 [shape = 'u32[]', space=smem, size = 0x4, offset = 0x4, fixed_abs, tag = 'smem constant byte address 0x4 - core index']
  #allocation1 [shape = 'u32[144,128]{1,0:T(1,128)}', space=vmem, size = 0x12000, scoped, tag = 'internal scratch']
  %s0 = inlined_call_operand.vmem [shape: bf16[16,4], index: 0, kind: input, shape index: {}]
  %s1 = inlined_call_operand.vmem [shape: bf16[16,128], index: 1, kind: input, shape index: {}]
  %s2 = inlined_call_operand.vmem [shape: bf16[4,384], index: 2, kind: input, shape index: {}]
  %s3 = inlined_call_operand.vmem [shape: bf16[128,256], index: 3, kind: input, shape index: {}]
  %s4 = inlined_call_operand.vmem [shape: bf16[16,640], index: 4, kind: output, shape index: {}]
  %s5 = sld [smem:[#allocation0]]
  $region26: #{gconv_gru_forward.3} parent=0
    _
  %s7 = ssub.s32 1, %s5
  %s8 = scalar_select 0, %s7, %s5
  // Predicated region
  $region2: #{gconv_gru_forward.3} parent=0 // pred_check
    _
  $region3: #{gconv_gru_forward.3} parent=0 // pred_check_branch
    %10 = sbr.rel (0) target = $region5
  $region4: #{gconv_gru_forward.3} parent=0 // pred_region
    _
  $region5: #{gconv_gru_forward.3} parent=0 // pred_fallthru
    _
  // Predicated region
  $region6: #{gconv_gru_forward.3} parent=0 // pred_check
    _
  $region7: #{gconv_gru_forward.3} parent=0 // pred_check_branch
    %12 = sbr.rel (0) target = $region9
  $region8: #{gconv_gru_forward.3} parent=0 // pred_region
    _
  $region9: #{gconv_gru_forward.3} parent=0 // pred_fallthru
    _
  // Predicated region
  $region10: #{gconv_gru_forward.3} parent=0 // pred_check
    _
  $region11: #{gconv_gru_forward.3} parent=0 // pred_check_branch
    %14 = sbr.rel (0) target = $region13
  $region12: #{gconv_gru_forward.3} parent=0 // pred_region
    _
  $region13: #{gconv_gru_forward.3} parent=0 // pred_fallthru
    _
  // Predicated region
  $region14: #{gconv_gru_forward.3} parent=0 // pred_check
    _
  $region15: #{gconv_gru_forward.3} parent=0 // pred_check_branch
    %16 = sbr.rel (0) target = $region17
  $region16: #{gconv_gru_forward.3} parent=0 // pred_region
    _
  $region17: #{gconv_gru_forward.3} parent=0 // pred_fallthru
    _
  %v18 = vld [vmem:[%s0] sm:$0xf]
  %v19 = vld [vmem:[%s0 + $0x4] sm:$0xf]
  %v20 = vld [vmem:[%s2] sm:$0x3f]
  %v23 = vunpack.c.l.b16 %v18
  %v24 = vunpack.c.l.b16 %v19
  %v25 = vpack.c.b16 %v24, %v23
  %v27 = vcombine.high %v20, %v20
  %v29 = vunpack.c.l.s4 1983009808
  %v30 = vunpack.c.0.s8 %v29
  %v31 = vlaneseq
  %v32 = vshrl.u32 %v31, 7
  %v33 = vsub.s32 %v30, %v32
  %v34 = vrot.slane %v20, %v33
  %v36 = vunpack.c.l.s4 1983009808
  %v37 = vunpack.c.0.s8 %v36
  %v38 = vlaneseq
  %v39 = vshrl.u32 %v38, 7
  %v40 = vsub.s32 %v37, %v39
  %v41 = vrot.slane %v27, %v40
  %v42 = vcombine.high %v34, %v34
  %vm43 = vcmask 31744
  %v45 = vsel %vm43, %v25, 0
  %vm47 = vcmask 1041408
  %v49 = vsel %vm47, %v34, 0
  %v52 = vsel %vm47, %v42, 0
  %v55 = vsel %vm47, %v41, 0
  %57 = vmatprep.subr.bf16.mxu0 0
  %58 = vmatpush1.bf16.msra.mxu0 0
  %59 = vmatprep.subr.bf16.mxu0 0
  %60 = vmatpush1.bf16.msra.mxu0 0
  %61 = vmatprep.subr.bf16.mxu0 0
  %62 = vmatpush1.bf16.msra.mxu0 0
  %63 = vmatprep.subr.bf16.mxu0 0
  %64 = vmatpush1.bf16.msra.mxu0 0
  %65 = vmatprep.subr.bf16.mxu0 0
  %66 = vmatpush1.bf16.msra.mxu0 0
  %67 = vmatprep.subr.bf16.mxu0 0
  %68 = vmatpush1.bf16.msra.mxu0 0
  %69 = vmatprep.subr.bf16.mxu0 0
  %70 = vmatpush1.bf16.msra.mxu0 0
  %71 = vmatprep.subr.bf16.mxu0 %v52
  %72 = vmatpush1.bf16.msra.mxu0 %v49
  %73 = vmatprep.subr.bf16.mxu0 0
  %74 = vmatpush2.bf16.msra.mxu0 0
  %75 = vmatprep.subr.bf16.mxu0 0
  %76 = vmatpush2.bf16.msra.mxu0 0
  %77 = vmatprep.subr.bf16.mxu0 0
  %78 = vmatpush2.bf16.msra.mxu0 0
  %79 = vmatprep.subr.bf16.mxu0 0
  %80 = vmatpush2.bf16.msra.mxu0 0
  %81 = vmatprep.subr.bf16.mxu0 0
  %82 = vmatpush2.bf16.msra.mxu0 0
  %83 = vmatprep.subr.bf16.mxu0 0
  %84 = vmatpush2.bf16.msra.mxu0 0
  %85 = vmatprep.subr.bf16.mxu0 0
  %86 = vmatpush2.bf16.msra.mxu0 0
  %87 = vmatprep.subr.bf16.mxu0 0
  %88 = vmatpush2.bf16.msra.mxu0 0
  %89 = vmatprep.mubr.bf16.mxu0 0
  %90 = vmatmul.mubr.bf16.gmra.mxu0 %v45
  %v91 = vpop.f32.mrf.mxu0
  %v92 = vadd.f32 0.0, %v91
  %v93 = vpop.f32.mrf.mxu0
  %v94 = vadd.f32 0.0, %v93
  %v95 = vpop.f32.mrf.mxu0
  %v96 = vadd.f32 0.0, %v95
  %v97 = vpop.f32.mrf.mxu0
  %v98 = vadd.f32 0.0, %v97
  %99 = vdwg.mxu0
  %100 = vmatprep.subr.bf16.mxu0 0
  %101 = vmatpush1.bf16.msra.mxu0 0
  %102 = vmatprep.subr.bf16.mxu0 0
  %103 = vmatpush1.bf16.msra.mxu0 0
  %104 = vmatprep.subr.bf16.mxu0 0
  %105 = vmatpush1.bf16.msra.mxu0 0
  %106 = vmatprep.subr.bf16.mxu0 0
  %107 = vmatpush1.bf16.msra.mxu0 0
  %108 = vmatprep.subr.bf16.mxu0 0
  %109 = vmatpush1.bf16.msra.mxu0 0
  %110 = vmatprep.subr.bf16.mxu0 0
  %111 = vmatpush1.bf16.msra.mxu0 0
  %112 = vmatprep.subr.bf16.mxu0 0
  %113 = vmatpush1.bf16.msra.mxu0 0
  %114 = vmatprep.subr.bf16.mxu0 0
  %115 = vmatpush1.bf16.msra.mxu0 %v55
  %116 = vmatprep.subr.bf16.mxu0 0
  %117 = vmatpush2.bf16.msra.mxu0 0
  %118 = vmatprep.subr.bf16.mxu0 0
  %119 = vmatpush2.bf16.msra.mxu0 0
  %120 = vmatprep.subr.bf16.mxu0 0
  %121 = vmatpush2.bf16.msra.mxu0 0
  %122 = vmatprep.subr.bf16.mxu0 0
  %123 = vmatpush2.bf16.msra.mxu0 0
  %124 = vmatprep.subr.bf16.mxu0 0
  %125 = vmatpush2.bf16.msra.mxu0 0
  %126 = vmatprep.subr.bf16.mxu0 0
  %127 = vmatpush2.bf16.msra.mxu0 0
  %128 = vmatprep.subr.bf16.mxu0 0
  %129 = vmatpush2.bf16.msra.mxu0 0
  %130 = vmatprep.subr.bf16.mxu0 0
  %131 = vmatpush2.bf16.msra.mxu0 0
  %132 = vmatprep.mubr.bf16.mxu0 0
  %133 = vmatmul.mubr.bf16.gmra.mxu0 %v45
  %v134 = vpop.f32.mrf.mxu0
  %v135 = vadd.f32 0.0, %v134
  %v136 = vpop.f32.mrf.mxu0
  %v137 = vpop.f32.mrf.mxu0
  %v138 = vadd.f32 0.0, %v137
  %v139 = vpop.f32.mrf.mxu0
  %140 = vdwg.mxu0
  %v141 = vld [vmem:[%s1] sm:$0xf]
  %v142 = vld [vmem:[%s1 + $0x4] sm:$0xf]
  %v143 = vld [vmem:[%s3] sm:$0xff]
  %v144 = vld [vmem:[%s3 + $0x8] sm:$0xff]
  %v145 = vld [vmem:[%s3 + $0x10] sm:$0xff]
  %v146 = vld [vmem:[%s3 + $0x18] sm:$0xff]
  %v147 = vld [vmem:[%s3 + $0x20] sm:$0xff]
  %v148 = vld [vmem:[%s3 + $0x28] sm:$0xff]
  %v149 = vld [vmem:[%s3 + $0x30] sm:$0xff]
  %v150 = vld [vmem:[%s3 + $0x38] sm:$0xff]
  %v151 = vld [vmem:[%s3 + $0x40] sm:$0xff]
  %v152 = vld [vmem:[%s3 + $0x48] sm:$0xff]
  %v153 = vld [vmem:[%s3 + $0x50] sm:$0xff]
  %v154 = vld [vmem:[%s3 + $0x58] sm:$0xff]
  %v155 = vld [vmem:[%s3 + $0x60] sm:$0xff]
  %v156 = vld [vmem:[%s3 + $0x68] sm:$0xff]
  %v157 = vld [vmem:[%s3 + $0x70] sm:$0xff]
  %v158 = vld [vmem:[%s3 + $0x78] sm:$0xff]
  %v161 = vunpack.c.l.b16 %v141
  %v162 = vunpack.c.l.b16 %v142
  %v163 = vpack.c.b16 %v162, %v161
  %v181 = vunpack.c.l.b16 %v143
  %v182 = vunpack.c.h.b16 %v143
  %v183 = vunpack.c.l.b16 %v144
  %v184 = vunpack.c.h.b16 %v144
  %v185 = vunpack.c.l.b16 %v145
  %v186 = vunpack.c.h.b16 %v145
  %v187 = vunpack.c.l.b16 %v146
  %v188 = vunpack.c.h.b16 %v146
  %v189 = vunpack.c.l.b16 %v147
  %v190 = vunpack.c.h.b16 %v147
  %v191 = vunpack.c.l.b16 %v148
  %v192 = vunpack.c.h.b16 %v148
  %v193 = vunpack.c.l.b16 %v149
  %v194 = vunpack.c.h.b16 %v149
  %v195 = vunpack.c.l.b16 %v150
  %v196 = vunpack.c.h.b16 %v150
  %v197 = vunpack.c.l.b16 %v151
  %v198 = vunpack.c.h.b16 %v151
  %v199 = vunpack.c.l.b16 %v152
  %v200 = vunpack.c.h.b16 %v152
  %v201 = vunpack.c.l.b16 %v153
  %v202 = vunpack.c.h.b16 %v153
  %v203 = vunpack.c.l.b16 %v154
  %v204 = vunpack.c.h.b16 %v154
  %v205 = vunpack.c.l.b16 %v155
  %v206 = vunpack.c.h.b16 %v155
  %v207 = vunpack.c.l.b16 %v156
  %v208 = vunpack.c.h.b16 %v156
  %v209 = vunpack.c.l.b16 %v157
  %v210 = vunpack.c.h.b16 %v157
  %v211 = vunpack.c.l.b16 %v158
  %v212 = vunpack.c.h.b16 %v158
  %v213 = vpack.c.b16 %v183, %v181
  %v214 = vpack.c.b16 %v184, %v182
  %v215 = vpack.c.b16 %v187, %v185
  %v216 = vpack.c.b16 %v188, %v186
  %v217 = vpack.c.b16 %v191, %v189
  %v218 = vpack.c.b16 %v192, %v190
  %v219 = vpack.c.b16 %v195, %v193
  %v220 = vpack.c.b16 %v196, %v194
  %v221 = vpack.c.b16 %v199, %v197
  %v222 = vpack.c.b16 %v200, %v198
  %v223 = vpack.c.b16 %v203, %v201
  %v224 = vpack.c.b16 %v204, %v202
  %v225 = vpack.c.b16 %v207, %v205
  %v226 = vpack.c.b16 %v208, %v206
  %v227 = vpack.c.b16 %v211, %v209
  %v228 = vpack.c.b16 %v212, %v210
  %245 = vmatprep.subr.bf16.mxu0 %v228
  %246 = vmatpush1.bf16.msra.mxu0 %v227
  %247 = vmatprep.subr.bf16.mxu0 %v226
  %248 = vmatpush1.bf16.msra.mxu0 %v225
  %249 = vmatprep.subr.bf16.mxu0 %v224
  %250 = vmatpush1.bf16.msra.mxu0 %v223
  %251 = vmatprep.subr.bf16.mxu0 %v222
  %252 = vmatpush1.bf16.msra.mxu0 %v221
  %253 = vmatprep.subr.bf16.mxu0 %v220
  %254 = vmatpush1.bf16.msra.mxu0 %v219
  %255 = vmatprep.subr.bf16.mxu0 %v218
  %256 = vmatpush1.bf16.msra.mxu0 %v217
  %257 = vmatprep.subr.bf16.mxu0 %v216
  %258 = vmatpush1.bf16.msra.mxu0 %v215
  %259 = vmatprep.subr.bf16.mxu0 %v214
  %260 = vmatpush1.bf16.msra.mxu0 %v213
  %261 = vmatprep.subr.bf16.mxu0 0
  %262 = vmatpush2.bf16.msra.mxu0 0
  %263 = vmatprep.subr.bf16.mxu0 0
  %264 = vmatpush2.bf16.msra.mxu0 0
  %265 = vmatprep.subr.bf16.mxu0 0
  %266 = vmatpush2.bf16.msra.mxu0 0
  %267 = vmatprep.subr.bf16.mxu0 0
  %268 = vmatpush2.bf16.msra.mxu0 0
  %269 = vmatprep.subr.bf16.mxu0 0
  %270 = vmatpush2.bf16.msra.mxu0 0
  %271 = vmatprep.subr.bf16.mxu0 0
  %272 = vmatpush2.bf16.msra.mxu0 0
  %273 = vmatprep.subr.bf16.mxu0 0
  %274 = vmatpush2.bf16.msra.mxu0 0
  %275 = vmatprep.subr.bf16.mxu0 0
  %276 = vmatpush2.bf16.msra.mxu0 0
  %277 = vmatprep.mubr.bf16.mxu0 0
  %278 = vmatmul.mubr.bf16.gmra.mxu0 %v163
  %v279 = vpop.f32.mrf.mxu0
  %v280 = vadd.f32 0.0, %v279
  %v281 = vpop.f32.mrf.mxu0
  %v282 = vadd.f32 0.0, %v281
  %v283 = vpop.f32.mrf.mxu0
  %v284 = vadd.f32 0.0, %v283
  %v285 = vpop.f32.mrf.mxu0
  %v286 = vadd.f32 0.0, %v285
  %287 = vdwg.mxu0
  %v288 = vpack.c.bf16 %v96, %v92
  %v289 = vpack.c.bf16 %v98, %v94
  %v290 = vpack.c.bf16 %v138, %v135
  %v294 = vunpack.c.l.b16 %v288
  %v295 = vunpack.c.l.b16 %v289
  %v296 = vunpack.c.l.b16 %v290
  %v297 = vunpack.c.h.b16 %v288
  %v298 = vunpack.c.h.b16 %v289
  %v299 = vunpack.c.h.b16 %v290
  %v300 = vpack.c.b16 %v295, %v294
  %v301 = vpack.c.b16 %v296, %v296
  %v302 = vpack.c.b16 %v298, %v297
  %v303 = vpack.c.b16 %v299, %v299
  %308 = vst [vmem:[%s4] sm:$0xff] %v300
  %309 = vst [vmem:[%s4 + $0x8] sm:$0xf] %v301
  %310 = vst [vmem:[%s4 + $0x14] sm:$0xff] %v302
  %311 = vst [vmem:[%s4 + $0x1c] sm:$0xf] %v303
  %v312 = vpack.c.bf16 %v284, %v280
  %v313 = vpack.c.bf16 %v286, %v282
  %v316 = vunpack.c.l.b16 %v312
  %v317 = vunpack.c.l.b16 %v313
  %v318 = vunpack.c.h.b16 %v312
  %v319 = vunpack.c.h.b16 %v313
  %v320 = vpack.c.b16 %v317, %v316
  %v321 = vpack.c.b16 %v319, %v318
  %324 = vst [vmem:[%s4 + $0xc] sm:$0xff] %v320
  %325 = vst [vmem:[%s4 + $0x20] sm:$0xff] %v321
  // Predicated region
  $region18: #{gconv_gru_forward.3} parent=0 // pred_check
    _
  $region19: #{gconv_gru_forward.3} parent=0 // pred_check_branch
    %327 = sbr.rel (0) target = $region21
  $region20: #{gconv_gru_forward.3} parent=0 // pred_region
    _
  $region21: #{gconv_gru_forward.3} parent=0 // pred_fallthru
    _
  // Predicated region
  $region22: #{gconv_gru_forward.3} parent=0 // pred_check
    _
  $region23: #{gconv_gru_forward.3} parent=0 // pred_check_branch
    %329 = sbr.rel (0) target = $region25
  $region24: #{gconv_gru_forward.3} parent=0 // pred_region
    _
  $region25: #{gconv_gru_forward.3} parent=0 // pred_fallthru
    _

// kernel: gconv_gru_forward.4
$region0: #{gconv_gru_forward.4}
  #allocation0 [shape = 'u32[]', space=smem, size = 0x4, offset = 0x4, fixed_abs, tag = 'smem constant byte address 0x4 - core index']
  #allocation1 [shape = 'u32[144,128]{1,0:T(1,128)}', space=vmem, size = 0x12000, scoped, tag = 'internal scratch']
  %s0 = inlined_call_operand.vmem [shape: bf16[16,16], index: 0, kind: input, shape index: {}]
  %s1 = inlined_call_operand.vmem [shape: bf16[16,640], index: 1, kind: input, shape index: {}]
  %s2 = inlined_call_operand.vmem [shape: f32[16,128], index: 2, kind: input, shape index: {}]
  %s3 = inlined_call_operand.vmem [shape: bf16[128,128], index: 3, kind: input, shape index: {}]
  %s4 = inlined_call_operand.vmem [shape: f32[1,128], index: 4, kind: input, shape index: {}]
  %s5 = inlined_call_operand.vmem [shape: f32[1,128], index: 5, kind: input, shape index: {}]
  %s6 = inlined_call_operand.vmem [shape: f32[1,128], index: 6, kind: input, shape index: {}]
  %s7 = inlined_call_operand.vmem [shape: f32[16,128], index: 7, kind: output, shape index: {0}]
  %s8 = inlined_call_operand.vmem [shape: f32[16,128], index: 8, kind: output, shape index: {1}]
  %s9 = inlined_call_operand.vmem [shape: bf16[16,128], index: 9, kind: output, shape index: {2}]
  %10 = xla_tuple %s7, %s8, %s9
  %s11 = sld [smem:[#allocation0]]
  $region54: #{gconv_gru_forward.4} parent=0
    _
  %s13 = ssub.s32 1, %s11
  %s14 = scalar_select 0, %s13, %s11
  // Predicated region
  $region2: #{gconv_gru_forward.4} parent=0 // pred_check
    _
  $region3: #{gconv_gru_forward.4} parent=0 // pred_check_branch
    %16 = sbr.rel (0) target = $region5
  $region4: #{gconv_gru_forward.4} parent=0 // pred_region
    _
  $region5: #{gconv_gru_forward.4} parent=0 // pred_fallthru
    _
  // Predicated region
  $region6: #{gconv_gru_forward.4} parent=0 // pred_check
    _
  $region7: #{gconv_gru_forward.4} parent=0 // pred_check_branch
    %18 = sbr.rel (0) target = $region9
  $region8: #{gconv_gru_forward.4} parent=0 // pred_region
    _
  $region9: #{gconv_gru_forward.4} parent=0 // pred_fallthru
    _
  // Predicated region
  $region10: #{gconv_gru_forward.4} parent=0 // pred_check
    _
  $region11: #{gconv_gru_forward.4} parent=0 // pred_check_branch
    %20 = sbr.rel (0) target = $region13
  $region12: #{gconv_gru_forward.4} parent=0 // pred_region
    _
  $region13: #{gconv_gru_forward.4} parent=0 // pred_fallthru
    _
  // Predicated region
  $region14: #{gconv_gru_forward.4} parent=0 // pred_check
    _
  $region15: #{gconv_gru_forward.4} parent=0 // pred_check_branch
    %22 = sbr.rel (0) target = $region17
  $region16: #{gconv_gru_forward.4} parent=0 // pred_region
    _
  $region17: #{gconv_gru_forward.4} parent=0 // pred_fallthru
    _
  // Predicated region
  $region18: #{gconv_gru_forward.4} parent=0 // pred_check
    _
  $region19: #{gconv_gru_forward.4} parent=0 // pred_check_branch
    %24 = sbr.rel (0) target = $region21
  $region20: #{gconv_gru_forward.4} parent=0 // pred_region
    _
  $region21: #{gconv_gru_forward.4} parent=0 // pred_fallthru
    _
  // Predicated region
  $region22: #{gconv_gru_forward.4} parent=0 // pred_check
    _
  $region23: #{gconv_gru_forward.4} parent=0 // pred_check_branch
    %26 = sbr.rel (0) target = $region25
  $region24: #{gconv_gru_forward.4} parent=0 // pred_region
    _
  $region25: #{gconv_gru_forward.4} parent=0 // pred_fallthru
    _
  // Predicated region
  $region26: #{gconv_gru_forward.4} parent=0 // pred_check
    _
  $region27: #{gconv_gru_forward.4} parent=0 // pred_check_branch
    %28 = sbr.rel (0) target = $region29
  $region28: #{gconv_gru_forward.4} parent=0 // pred_region
    _
  $region29: #{gconv_gru_forward.4} parent=0 // pred_fallthru
    _
  %v30 = vld [vmem:[%s0] sm:$0xf]
  %v31 = vld [vmem:[%s0 + $0x4] sm:$0xf]
  %v32 = vld [vmem:[%s1] sm:$0xff]
  %v33 = vld [vmem:[%s1 + $0x8] sm:$0xff]
  %v34 = vld [vmem:[%s1 + $0x10] sm:$0xf]
  %v35 = vld [vmem:[%s1 + $0x14] sm:$0xff]
  %v36 = vld [vmem:[%s1 + $0x1c] sm:$0xff]
  %v37 = vld [vmem:[%s1 + $0x24] sm:$0xf]
  %v40 = vunpack.c.l.b16 %v30
  %v41 = vunpack.c.l.b16 %v31
  %v42 = vpack.c.b16 %v41, %v40
  %v49 = vunpack.c.l.b16 %v32
  %v50 = vunpack.c.h.b16 %v32
  %v51 = vunpack.c.l.b16 %v33
  %v52 = vunpack.c.h.b16 %v33
  %v53 = vunpack.c.l.b16 %v34
  %v54 = vunpack.c.l.b16 %v35
  %v55 = vunpack.c.h.b16 %v35
  %v56 = vunpack.c.l.b16 %v36
  %v57 = vunpack.c.h.b16 %v36
  %v58 = vunpack.c.l.b16 %v37
  %v59 = vpack.c.b16 %v54, %v49
  %v60 = vpack.c.b16 %v55, %v50
  %v61 = vpack.c.b16 %v56, %v51
  %v62 = vpack.c.b16 %v57, %v52
  %v63 = vpack.c.b16 %v58, %v53
  %vm69 = vcmask 130048
  %v71 = vsel %vm69, %v42, 0
  %73 = vmatprep.subr.bf16.mxu0 0
  %74 = vmatpush1.bf16.msra.mxu0 0
  %75 = vmatprep.subr.bf16.mxu0 0
  %76 = vmatpush1.bf16.msra.mxu0 0
  %77 = vmatprep.subr.bf16.mxu0 0
  %78 = vmatpush1.bf16.msra.mxu0 0
  %79 = vmatprep.subr.bf16.mxu0 0
  %80 = vmatpush1.bf16.msra.mxu0 0
  %81 = vmatprep.subr.bf16.mxu0 0
  %82 = vmatpush1.bf16.msra.mxu0 0
  %83 = vmatprep.subr.bf16.mxu0 0
  %84 = vmatpush1.bf16.msra.mxu0 0
  %85 = vmatprep.subr.bf16.mxu0 0
  %86 = vmatpush1.bf16.msra.mxu0 0
  %87 = vmatprep.subr.bf16.mxu0 %v60
  %88 = vmatpush1.bf16.msra.mxu0 %v59
  %89 = vmatprep.subr.bf16.mxu0 0
  %90 = vmatpush2.bf16.msra.mxu0 0
  %91 = vmatprep.subr.bf16.mxu0 0
  %92 = vmatpush2.bf16.msra.mxu0 0
  %93 = vmatprep.subr.bf16.mxu0 0
  %94 = vmatpush2.bf16.msra.mxu0 0
  %95 = vmatprep.subr.bf16.mxu0 0
  %96 = vmatpush2.bf16.msra.mxu0 0
  %97 = vmatprep.subr.bf16.mxu0 0
  %98 = vmatpush2.bf16.msra.mxu0 0
  %99 = vmatprep.subr.bf16.mxu0 0
  %100 = vmatpush2.bf16.msra.mxu0 0
  %101 = vmatprep.subr.bf16.mxu0 0
  %102 = vmatpush2.bf16.msra.mxu0 0
  %103 = vmatprep.subr.bf16.mxu0 0
  %104 = vmatpush2.bf16.msra.mxu0 0
  %105 = vmatprep.mubr.bf16.mxu0 0
  %106 = vmatmul.mubr.bf16.gmra.mxu0 %v71
  %v107 = vpop.f32.mrf.mxu0
  %v108 = vadd.f32 0.0, %v107
  %v109 = vpop.f32.mrf.mxu0
  %v110 = vadd.f32 0.0, %v109
  %v111 = vpop.f32.mrf.mxu0
  %v112 = vadd.f32 0.0, %v111
  %v113 = vpop.f32.mrf.mxu0
  %v114 = vadd.f32 0.0, %v113
  %115 = vdwg.mxu0
  %116 = vmatprep.subr.bf16.mxu0 0
  %117 = vmatpush1.bf16.msra.mxu0 0
  %118 = vmatprep.subr.bf16.mxu0 0
  %119 = vmatpush1.bf16.msra.mxu0 0
  %120 = vmatprep.subr.bf16.mxu0 0
  %121 = vmatpush1.bf16.msra.mxu0 0
  %122 = vmatprep.subr.bf16.mxu0 0
  %123 = vmatpush1.bf16.msra.mxu0 0
  %124 = vmatprep.subr.bf16.mxu0 0
  %125 = vmatpush1.bf16.msra.mxu0 0
  %126 = vmatprep.subr.bf16.mxu0 0
  %127 = vmatpush1.bf16.msra.mxu0 0
  %128 = vmatprep.subr.bf16.mxu0 0
  %129 = vmatpush1.bf16.msra.mxu0 0
  %130 = vmatprep.subr.bf16.mxu0 %v62
  %131 = vmatpush1.bf16.msra.mxu0 %v61
  %132 = vmatprep.subr.bf16.mxu0 0
  %133 = vmatpush2.bf16.msra.mxu0 0
  %134 = vmatprep.subr.bf16.mxu0 0
  %135 = vmatpush2.bf16.msra.mxu0 0
  %136 = vmatprep.subr.bf16.mxu0 0
  %137 = vmatpush2.bf16.msra.mxu0 0
  %138 = vmatprep.subr.bf16.mxu0 0
  %139 = vmatpush2.bf16.msra.mxu0 0
  %140 = vmatprep.subr.bf16.mxu0 0
  %141 = vmatpush2.bf16.msra.mxu0 0
  %142 = vmatprep.subr.bf16.mxu0 0
  %143 = vmatpush2.bf16.msra.mxu0 0
  %144 = vmatprep.subr.bf16.mxu0 0
  %145 = vmatpush2.bf16.msra.mxu0 0
  %146 = vmatprep.subr.bf16.mxu0 0
  %147 = vmatpush2.bf16.msra.mxu0 0
  %148 = vmatprep.mubr.bf16.mxu0 0
  %149 = vmatmul.mubr.bf16.gmra.mxu0 %v71
  %v150 = vpop.f32.mrf.mxu0
  %v151 = vadd.f32 0.0, %v150
  %v152 = vpop.f32.mrf.mxu0
  %v153 = vadd.f32 0.0, %v152
  %v154 = vpop.f32.mrf.mxu0
  %v155 = vadd.f32 0.0, %v154
  %v156 = vpop.f32.mrf.mxu0
  %v157 = vadd.f32 0.0, %v156
  %158 = vdwg.mxu0
  %159 = vmatprep.subr.bf16.mxu0 0
  %160 = vmatpush1.bf16.msra.mxu0 0
  %161 = vmatprep.subr.bf16.mxu0 0
  %162 = vmatpush1.bf16.msra.mxu0 0
  %163 = vmatprep.subr.bf16.mxu0 0
  %164 = vmatpush1.bf16.msra.mxu0 0
  %165 = vmatprep.subr.bf16.mxu0 0
  %166 = vmatpush1.bf16.msra.mxu0 0
  %167 = vmatprep.subr.bf16.mxu0 0
  %168 = vmatpush1.bf16.msra.mxu0 0
  %169 = vmatprep.subr.bf16.mxu0 0
  %170 = vmatpush1.bf16.msra.mxu0 0
  %171 = vmatprep.subr.bf16.mxu0 0
  %172 = vmatpush1.bf16.msra.mxu0 0
  %173 = vmatprep.subr.bf16.mxu0 0
  %174 = vmatpush1.bf16.msra.mxu0 %v63
  %175 = vmatprep.subr.bf16.mxu0 0
  %176 = vmatpush2.bf16.msra.mxu0 0
  %177 = vmatprep.subr.bf16.mxu0 0
  %178 = vmatpush2.bf16.msra.mxu0 0
  %179 = vmatprep.subr.bf16.mxu0 0
  %180 = vmatpush2.bf16.msra.mxu0 0
  %181 = vmatprep.subr.bf16.mxu0 0
  %182 = vmatpush2.bf16.msra.mxu0 0
  %183 = vmatprep.subr.bf16.mxu0 0
  %184 = vmatpush2.bf16.msra.mxu0 0
  %185 = vmatprep.subr.bf16.mxu0 0
  %186 = vmatpush2.bf16.msra.mxu0 0
  %187 = vmatprep.subr.bf16.mxu0 0
  %188 = vmatpush2.bf16.msra.mxu0 0
  %189 = vmatprep.subr.bf16.mxu0 0
  %190 = vmatpush2.bf16.msra.mxu0 0
  %191 = vmatprep.mubr.bf16.mxu0 0
  %192 = vmatmul.mubr.bf16.gmra.mxu0 %v71
  %v193 = vpop.f32.mrf.mxu0
  %v194 = vadd.f32 0.0, %v193
  %v195 = vpop.f32.mrf.mxu0
  %v196 = vpop.f32.mrf.mxu0
  %v197 = vadd.f32 0.0, %v196
  %v198 = vpop.f32.mrf.mxu0
  %199 = vdwg.mxu0
  %v200 = vadd.f32 %v108, %v153
  %v201 = vadd.f32 %v112, %v157
  %v202 = vld [vmem:[%s4] sm:$0x1]
  %v204 = vlaneseq
  %v205 = vshrl.u32 %v204, 7
  %v206 = vsub.s32 0, %v205
  %v207 = vrot.slane %v202, %v206
  %v209 = vadd.f32 %v200, %v207
  %v210 = vadd.f32 %v201, %v207
  %v211 = vxor.u32 %v209, 2147483648
  %v212 = vxor.u32 %v210, 2147483648
  %v213 = vmul.f32 %v211, 1.442695
  %v214 = vpow.pop %v213
  %v215 = vmul.f32 %v212, 1.442695
  %v216 = vpow.pop %v215
  %v217 = vadd.f32 %v214, 1.0
  %v218 = vadd.f32 %v216, 1.0
  %v219 = vrcp.pop %v217
  %v220 = vmul.f32 1.0, %v219
  %v221 = vrcp.pop %v218
  %v222 = vmul.f32 1.0, %v221
  %v223 = vadd.f32 %v110, %v194
  %v224 = vadd.f32 %v114, %v197
  %v225 = vld [vmem:[%s5] sm:$0x1]
  %v227 = vlaneseq
  %v228 = vshrl.u32 %v227, 7
  %v229 = vsub.s32 0, %v228
  %v230 = vrot.slane %v225, %v229
  %v232 = vadd.f32 %v223, %v230
  %v233 = vadd.f32 %v224, %v230
  %v234 = vxor.u32 %v232, 2147483648
  %v235 = vxor.u32 %v233, 2147483648
  %v236 = vmul.f32 %v234, 1.442695
  %v237 = vpow.pop %v236
  %v238 = vmul.f32 %v235, 1.442695
  %v239 = vpow.pop %v238
  %v240 = vadd.f32 %v237, 1.0
  %v241 = vadd.f32 %v239, 1.0
  %v242 = vrcp.pop %v240
  %v243 = vmul.f32 1.0, %v242
  %v244 = vrcp.pop %v241
  %v245 = vmul.f32 1.0, %v244
  %246 = vst [vmem:[%s7] sm:$0xff] %v220
  %247 = vst [vmem:[%s7 + $0x8] sm:$0xff] %v222
  %v248 = vld [vmem:[%s6] sm:$0x1]
  %v250 = vlaneseq
  %v251 = vshrl.u32 %v250, 7
  %v252 = vsub.s32 0, %v251
  %v253 = vrot.slane %v248, %v252
  %v255 = vadd.f32 %v151, %v253
  %v256 = vadd.f32 %v155, %v253
  %257 = vst [vmem:[%s8] sm:$0xff] %v255
  %258 = vst [vmem:[%s8 + $0x8] sm:$0xff] %v256
  %v259 = vld [vmem:[%s2] sm:$0xff]
  %v260 = vld [vmem:[%s2 + $0x8] sm:$0xff]
  %v261 = vmul.f32 %v259, %v243
  %v262 = vmul.f32 %v260, %v245
  %v263 = vpack.c.bf16 %v262, %v261
  %v264 = vld [vmem:[%s3] sm:$0xf]
  %v265 = vld [vmem:[%s3 + $0x4] sm:$0xf]
  %v266 = vld [vmem:[%s3 + $0x8] sm:$0xf]
  %v267 = vld [vmem:[%s3 + $0xc] sm:$0xf]
  %v268 = vld [vmem:[%s3 + $0x10] sm:$0xf]
  %v269 = vld [vmem:[%s3 + $0x14] sm:$0xf]
  %v270 = vld [vmem:[%s3 + $0x18] sm:$0xf]
  %v271 = vld [vmem:[%s3 + $0x1c] sm:$0xf]
  %v272 = vld [vmem:[%s3 + $0x20] sm:$0xf]
  %v273 = vld [vmem:[%s3 + $0x24] sm:$0xf]
  %v274 = vld [vmem:[%s3 + $0x28] sm:$0xf]
  %v275 = vld [vmem:[%s3 + $0x2c] sm:$0xf]
  %v276 = vld [vmem:[%s3 + $0x30] sm:$0xf]
  %v277 = vld [vmem:[%s3 + $0x34] sm:$0xf]
  %v278 = vld [vmem:[%s3 + $0x38] sm:$0xf]
  %v279 = vld [vmem:[%s3 + $0x3c] sm:$0xf]
  %v296 = vunpack.c.l.b16 %v264
  %v297 = vunpack.c.l.b16 %v265
  %v298 = vunpack.c.l.b16 %v266
  %v299 = vunpack.c.l.b16 %v267
  %v300 = vunpack.c.l.b16 %v268
  %v301 = vunpack.c.l.b16 %v269
  %v302 = vunpack.c.l.b16 %v270
  %v303 = vunpack.c.l.b16 %v271
  %v304 = vunpack.c.l.b16 %v272
  %v305 = vunpack.c.l.b16 %v273
  %v306 = vunpack.c.l.b16 %v274
  %v307 = vunpack.c.l.b16 %v275
  %v308 = vunpack.c.l.b16 %v276
  %v309 = vunpack.c.l.b16 %v277
  %v310 = vunpack.c.l.b16 %v278
  %v311 = vunpack.c.l.b16 %v279
  %v312 = vpack.c.b16 %v297, %v296
  %v313 = vpack.c.b16 %v299, %v298
  %v314 = vpack.c.b16 %v301, %v300
  %v315 = vpack.c.b16 %v303, %v302
  %v316 = vpack.c.b16 %v305, %v304
  %v317 = vpack.c.b16 %v307, %v306
  %v318 = vpack.c.b16 %v309, %v308
  %v319 = vpack.c.b16 %v311, %v310
  %328 = vmatprep.subr.bf16.mxu0 0
  %329 = vmatpush1.bf16.msra.mxu0 %v319
  %330 = vmatprep.subr.bf16.mxu0 0
  %331 = vmatpush1.bf16.msra.mxu0 %v318
  %332 = vmatprep.subr.bf16.mxu0 0
  %333 = vmatpush1.bf16.msra.mxu0 %v317
  %334 = vmatprep.subr.bf16.mxu0 0
  %335 = vmatpush1.bf16.msra.mxu0 %v316
  %336 = vmatprep.subr.bf16.mxu0 0
  %337 = vmatpush1.bf16.msra.mxu0 %v315
  %338 = vmatprep.subr.bf16.mxu0 0
  %339 = vmatpush1.bf16.msra.mxu0 %v314
  %340 = vmatprep.subr.bf16.mxu0 0
  %341 = vmatpush1.bf16.msra.mxu0 %v313
  %342 = vmatprep.subr.bf16.mxu0 0
  %343 = vmatpush1.bf16.msra.mxu0 %v312
  %344 = vmatprep.subr.bf16.mxu0 0
  %345 = vmatpush2.bf16.msra.mxu0 0
  %346 = vmatprep.subr.bf16.mxu0 0
  %347 = vmatpush2.bf16.msra.mxu0 0
  %348 = vmatprep.subr.bf16.mxu0 0
  %349 = vmatpush2.bf16.msra.mxu0 0
  %350 = vmatprep.subr.bf16.mxu0 0
  %351 = vmatpush2.bf16.msra.mxu0 0
  %352 = vmatprep.subr.bf16.mxu0 0
  %353 = vmatpush2.bf16.msra.mxu0 0
  %354 = vmatprep.subr.bf16.mxu0 0
  %355 = vmatpush2.bf16.msra.mxu0 0
  %356 = vmatprep.subr.bf16.mxu0 0
  %357 = vmatpush2.bf16.msra.mxu0 0
  %358 = vmatprep.subr.bf16.mxu0 0
  %359 = vmatpush2.bf16.msra.mxu0 0
  %360 = vmatprep.mubr.bf16.mxu0 0
  %361 = vmatmul.mubr.bf16.gmra.mxu0 %v263
  %v362 = vpop.f32.mrf.mxu0
  %v363 = vadd.f32 0.0, %v362
  %v364 = vpop.f32.mrf.mxu0
  %v365 = vpop.f32.mrf.mxu0
  %v366 = vadd.f32 0.0, %v365
  %v367 = vpop.f32.mrf.mxu0
  %368 = vdwg.mxu0
  %v369 = vpack.c.bf16 %v366, %v363
  %v371 = vunpack.c.l.b16 %v369
  %v372 = vunpack.c.h.b16 %v369
  %v373 = vpack.c.b16 %v371, %v371
  %v374 = vpack.c.b16 %v372, %v372
  %377 = vst [vmem:[%s9] sm:$0xf] %v373
  %378 = vst [vmem:[%s9 + $0x4] sm:$0xf] %v374
  // Predicated region
  $region30: #{gconv_gru_forward.4} parent=0 // pred_check
    _
  $region31: #{gconv_gru_forward.4} parent=0 // pred_check_branch
    %380 = sbr.rel (0) target = $region33
  $region32: #{gconv_gru_forward.4} parent=0 // pred_region
    _
  $region33: #{gconv_gru_forward.4} parent=0 // pred_fallthru
    _
  // Predicated region
  $region34: #{gconv_gru_forward.4} parent=0 // pred_check
    _
  $region35: #{gconv_gru_forward.4} parent=0 // pred_check_branch
    %382 = sbr.rel (0) target = $region37
  $region36: #{gconv_gru_forward.4} parent=0 // pred_region
    _
  $region37: #{gconv_gru_forward.4} parent=0 // pred_fallthru
    _
  // Predicated region
  $region38: #{gconv_gru_forward.4} parent=0 // pred_check
    _
  $region39: #{gconv_gru_forward.4} parent=0 // pred_check_branch
    %384 = sbr.rel (0) target = $region41
  $region40: #{gconv_gru_forward.4} parent=0 // pred_region
    _
  $region41: #{gconv_gru_forward.4} parent=0 // pred_fallthru
    _
  // Predicated region
  $region42: #{gconv_gru_forward.4} parent=0 // pred_check
    _
  $region43: #{gconv_gru_forward.4} parent=0 // pred_check_branch
    %386 = sbr.rel (0) target = $region45
  $region44: #{gconv_gru_forward.4} parent=0 // pred_region
    _
  $region45: #{gconv_gru_forward.4} parent=0 // pred_fallthru
    _
  // Predicated region
  $region46: #{gconv_gru_forward.4} parent=0 // pred_check
    _
  $region47: #{gconv_gru_forward.4} parent=0 // pred_check_branch
    %388 = sbr.rel (0) target = $region49
  $region48: #{gconv_gru_forward.4} parent=0 // pred_region
    _
  $region49: #{gconv_gru_forward.4} parent=0 // pred_fallthru
    _
  // Predicated region
  $region50: #{gconv_gru_forward.4} parent=0 // pred_check
    _
  $region51: #{gconv_gru_forward.4} parent=0 // pred_check_branch
    %390 = sbr.rel (0) target = $region53
  $region52: #{gconv_gru_forward.4} parent=0 // pred_region
    _
  $region53: #{gconv_gru_forward.4} parent=0 // pred_fallthru
    _

</llo_original>
